<compile_context>
chip_gen: v5e
topology: v5e:2x2
jax: 0.10.0
libtpu: 0.0.40
codegen_flags: <defaults>
</compile_context>

<pallas_src>
import jax
import jax.numpy as jnp
from jax.experimental import pallas as pl
from jax.experimental.pallas import tpu as pltpu
import numpy as np


def fm_kernel(cross_ref, lin_ref, o_ref):
    # cross_ref: (tbi, E)     f32 -- depends only on output row i
    # lin_ref:   (1, tbj*E)   f32 -- lane-dense linear term, depends only on column j
    # o_ref:     (tbi, tbj*E) out_dtype
    cross = cross_ref[...]
    lin = lin_ref[...]
    E = cross.shape[1]
    tbj = lin.shape[1] // E
    # out[i, j*E + e] = sigmoid(cross[i, e] + linear[j]); single fused expression so the
    # broadcast/add/sigmoid stays in vregs and feeds the store directly.
    o_ref[...] = jax.nn.sigmoid(jnp.tile(cross, (1, tbj)) + lin).astype(o_ref.dtype)


def _largest_divisor_le(n, cap):
    t = min(n, cap)
    while n % t:
        t -= 1
    return t


def fm_forward(x, linear_weights, embed_table, *, tbi=None, tbj=None,
               out_dtype=jnp.float32, vmem_limit_bytes=None):
    B, F = x.shape
    NF, E = embed_table.shape

    x = x.astype(jnp.int32)
    w = linear_weights.astype(jnp.float32)
    table = embed_table.astype(jnp.float32)

    # ---- O(B*E) precompute in XLA (factor of B smaller than the B*B*E output). ----
    emb = table[x]                                           # (B, F, E)
    s = jnp.sum(emb, axis=1)                                 # (B, E)
    sq = jnp.sum(emb * emb, axis=1)                          # (B, E)
    cross = 0.5 * (s * s - sq)                               # (B, E)  f32
    linear = jnp.sum(w * x.astype(jnp.float32), axis=1)      # (B,)
    lin_lane = jnp.repeat(linear, E).reshape(1, B * E)       # (1, B*E) f32, lane-dense

    # ---- tile selection (output tile = tbi x tbj*E) ----
    if tbi is None:
        tbi = _largest_divisor_le(B, 256)   # sublane dim: grow this first
    if tbj is None:
        tbj = _largest_divisor_le(B, 128)   # keeps f32 output buffer <= ~4 MiB at E=32
    assert B % tbi == 0 and B % tbj == 0, "tile sizes must divide the batch"
    if out_dtype == jnp.bfloat16:
        assert tbi == B or tbi % 16 == 0, "bf16 output needs tbi % 16 == 0 (min tile (16,128))"

    grid = (B // tbi, B // tbj)
    cp_kwargs = dict(dimension_semantics=("parallel", "parallel"))
    if vmem_limit_bytes is not None:
        cp_kwargs["vmem_limit_bytes"] = vmem_limit_bytes

    out2d = pl.pallas_call(
        fm_kernel,
        out_shape=jax.ShapeDtypeStruct((B, B * E), out_dtype),
        grid=grid,
        in_specs=[
            pl.BlockSpec((tbi, E), lambda i, j: (i, 0)),         # cross, i-indexed
            pl.BlockSpec((1, tbj * E), lambda i, j: (0, j)),     # linear row, j-indexed
        ],
        out_specs=pl.BlockSpec((tbi, tbj * E), lambda i, j: (i, j)),
        compiler_params=pltpu.CompilerParams(**cp_kwargs),
    )(cross, lin_lane)
    # Free row-major reshape back to the PyTorch output shape (B, B, E).
    return out2d.reshape(B, B, E)


def fm_reference(x, linear_weights, embed_table):
    # Pure-JAX reference mirroring the PyTorch forward (incl. its broadcasting).
    emb = embed_table[x]                                               # (B, F, E)
    linear = jnp.sum(linear_weights * x.astype(jnp.float32),
                     axis=1, keepdims=True)                            # (B, 1)
    sos = jnp.sum(emb, axis=1, keepdims=True) ** 2                     # (B, 1, E)
    ssq = jnp.sum(emb ** 2, axis=1, keepdims=True)                     # (B, 1, E)
    cross = 0.5 * (sos - ssq)
    total = linear + cross                                             # -> (B, B, E)
    return jax.nn.sigmoid(total)


if __name__ == "__main__":
    num_fields, embed_dim, batch = 8, 32, 16
    key = jax.random.PRNGKey(0)
    k1, k2, k3 = jax.random.split(key, 3)
    # Deterministic synthetic parameters (shapes per FM.__init__):
    embed_table = jax.random.normal(k1, (num_fields, embed_dim), dtype=jnp.float32)
    linear_weights = jax.random.normal(k2, (num_fields,), dtype=jnp.float32)
    # x: integer field indices, shape (batch, num_fields)
    x = jax.random.randint(k3, (batch, num_fields), 0, num_fields, dtype=jnp.int32)

    ref = fm_reference(x, linear_weights, embed_table)

    # f32 path: at B=16 the tile defaults collapse to a single (16, 16*32) grid step.
    out = fm_forward(x, linear_weights, embed_table)
    out = jax.block_until_ready(out)
    assert out.shape == (batch, batch, embed_dim)
    np.testing.assert_allclose(np.asarray(out), np.asarray(ref), rtol=1e-5, atol=1e-5)

    # bf16 output path (halves HBM store traffic; f32 math inside the kernel).
    out_bf16 = fm_forward(x, linear_weights, embed_table, out_dtype=jnp.bfloat16)
    out_bf16 = jax.block_until_ready(out_bf16)
    np.testing.assert_allclose(np.asarray(out_bf16, dtype=np.float32), np.asarray(ref),
                               rtol=2e-2, atol=2e-2)

    print("KERNEL_OK")
</pallas_src>

<mosaic_0001>
module attributes {stable_mosaic.version = 11 : i64} {
  func.func @fm_kernel(%arg0: i32, %arg1: i32, %arg2: memref<16x32xf32, #tpu.memory_space<vmem>>, %arg3: memref<1x512xf32, #tpu.memory_space<vmem>>, %arg4: memref<16x512xf32, #tpu.memory_space<vmem>>) attributes {dimension_semantics = [#tpu.dimension_semantics<parallel>, #tpu.dimension_semantics<parallel>], iteration_bounds = array<i64: 1, 1>, scalar_prefetch = 0 : i64, scratch_operands = 0 : i64, tpu.core_type = #tpu.core_type<tc>, window_params = [{transform_indices = @transform_0, window_bounds = array<i64: 16, 32>}, {transform_indices = @transform_1, window_bounds = array<i64: 1, 512>}, {transform_indices = @transform_2, window_bounds = array<i64: 16, 512>}]} {
    %c0 = arith.constant 0 : index
    %c0_0 = arith.constant 0 : index
    %0 = vector.load %arg2[%c0, %c0_0] : memref<16x32xf32, #tpu.memory_space<vmem>>, vector<16x32xf32>
    %c0_1 = arith.constant 0 : index
    %c0_2 = arith.constant 0 : index
    %1 = vector.load %arg3[%c0_1, %c0_2] : memref<1x512xf32, #tpu.memory_space<vmem>>, vector<1x512xf32>
    %2 = tpu.concatenate %0, %0, %0, %0, %0, %0, %0, %0, %0, %0, %0, %0, %0, %0, %0, %0 in 1 : vector<16x32xf32>, vector<16x32xf32>, vector<16x32xf32>, vector<16x32xf32>, vector<16x32xf32>, vector<16x32xf32>, vector<16x32xf32>, vector<16x32xf32>, vector<16x32xf32>, vector<16x32xf32>, vector<16x32xf32>, vector<16x32xf32>, vector<16x32xf32>, vector<16x32xf32>, vector<16x32xf32>, vector<16x32xf32> -> vector<16x512xf32>
    %3 = vector.broadcast %1 : vector<1x512xf32> to vector<16x512xf32>
    %4 = arith.addf %2, %3 : vector<16x512xf32>
    %5 = arith.negf %4 : vector<16x512xf32>
    %6 = math.exp %5 : vector<16x512xf32>
    %cst = arith.constant 1.000000e+00 : f32
    %7 = vector.broadcast %cst : f32 to vector<16x512xf32>
    %8 = arith.addf %7, %6 : vector<16x512xf32>
    %9 = arith.divf %7, %8 : vector<16x512xf32>
    %c0_3 = arith.constant 0 : index
    %c0_4 = arith.constant 0 : index
    %10 = vector.load %arg4[%c0_3, %c0_4] : memref<16x512xf32, #tpu.memory_space<vmem>>, vector<16x512xf32>
    tpu.vector_store %arg4[%c0_3, %c0_4], %9 {strides = array<i32>} : memref<16x512xf32, #tpu.memory_space<vmem>>, vector<16x512xf32>,
    return
  }
  func.func @transform_0(%arg0: i32, %arg1: i32) -> (i32, i32) {
    %c0_i32 = arith.constant 0 : i32
    %c0_i32_0 = arith.constant 0 : i32
    return %arg0, %c0_i32 : i32, i32
  }
  func.func @transform_1(%arg0: i32, %arg1: i32) -> (i32, i32) {
    %c0_i32 = arith.constant 0 : i32
    %c0_i32_0 = arith.constant 0 : i32
    return %c0_i32, %arg1 : i32, i32
  }
  func.func @transform_2(%arg0: i32, %arg1: i32) -> (i32, i32) {
    %c0_i32 = arith.constant 0 : i32
    return %arg0, %arg1 : i32, i32
  }
}

</mosaic_0001>

<llo_original>
// kernel: tpu_custom_call.1
$region0: #{tpu_custom_call.1}
  #allocation0 [shape = 'u32[]', space=smem, size = 0x4, offset = 0x4, fixed_abs, tag = 'smem constant byte address 0x4 - core index']
  #allocation1 [shape = 'u32[72,128]{1,0:T(1,128)}', space=vmem, size = 0x9000, scoped, tag = 'internal scratch']
  %s0 = inlined_call_operand.hbm [shape: f32[16,32], index: 0, kind: input, shape index: {}]
  %s1 = inlined_call_operand.hbm [shape: f32[1,512], index: 1, kind: input, shape index: {}]
  %s2 = inlined_call_operand.hbm [shape: f32[16,512], index: 2, kind: output, shape index: {}]
  %s3 = sld [smem:[#allocation0]]
  $region26: #{tpu_custom_call.1} parent=0
    _
  %s5 = ssub.s32 1, %s3
  %s6 = scalar_select 0, %s5, %s3
  $region1: #{tpu_custom_call.1} parent=0
    #allocation2 [shape = 'u8[8192]{0}', space=vmem, size = 0x2000, scoped, tag = 'input window, operand 0, single buffered']
    #allocation3 [shape = 's32[1]{0}', space=sflag, size = 0x4, scoped, tag = 'scoped memory for tpu_custom_call.1']
    #allocation4 [shape = 's32[1]{0}', space=sflag, size = 0x4, scoped, tag = 'scoped memory for tpu_custom_call.1']
    #allocation5 [shape = 'u8[2048]{0}', space=vmem, size = 0x800, scoped, tag = 'input window, operand 1, single buffered']
    #allocation6 [shape = 's32[1]{0}', space=sflag, size = 0x4, scoped, tag = 'scoped memory for tpu_custom_call.1']
    #allocation7 [shape = 'u8[32768]{0}', space=vmem, size = 0x8000, scoped, tag = 'output window, operand 0, single buffered']
    %7 = vsyncpa [#allocation3], 0
    %8 = vsyncpa [#allocation6], 0
    %9 = vsyncpa [#allocation4], 0
    // Predicated region
    $region2: #{tpu_custom_call.1} parent=1 // pred_check
      _
    $region3: #{tpu_custom_call.1} parent=1 // pred_check_branch
      %11 = sbr.rel (0) target = $region5
    $region4: #{tpu_custom_call.1} parent=1 // pred_region
      %13 = vsyncadd [#allocation3], 0
      %s14 = sshll.u32 %s0, 4
      %s15 = int_to_ptr.hbm [resolvable:$true] %s14
      %s16 = sshll.u32 [#allocation2], 4
      %s17 = int_to_ptr.vmem [resolvable:$true] %s16
      %22 = dma.hbm_to_vmem [thread:$0]  %s15, 256, %s17, [#allocation3], 128, 128, 8
    $region5: #{tpu_custom_call.1} parent=1 // pred_fallthru
      _
    // Predicated region
    $region6: #{tpu_custom_call.1} parent=1 // pred_check
      _
    $region7: #{tpu_custom_call.1} parent=1 // pred_check_branch
      %24 = sbr.rel (0) target = $region9
    $region8: #{tpu_custom_call.1} parent=1 // pred_region
      %26 = vsyncadd [#allocation6], 0
      %s28 = sshll.u32 %s1, 4
      %s29 = int_to_ptr.hbm [resolvable:$true] %s28
      %s30 = sshll.u32 [#allocation5], 4
      %s31 = int_to_ptr.vmem [resolvable:$true] %s30
      %33 = dma.hbm_to_vmem [thread:$0]  %s29, 64, %s31, [#allocation6]
    $region9: #{tpu_custom_call.1} parent=1 // pred_fallthru
      _
    // Predicated region
    $region10: #{tpu_custom_call.1} parent=1 // pred_check
      _
    $region11: #{tpu_custom_call.1} parent=1 // pred_check_branch
      %35 = sbr.rel (0) target = $region13
    $region12: #{tpu_custom_call.1} parent=1 // pred_region
      %37 = dma.done [#allocation3], 256
    $region13: #{tpu_custom_call.1} parent=1 // pred_fallthru
      _
    // Predicated region
    $region14: #{tpu_custom_call.1} parent=1 // pred_check
      _
    $region15: #{tpu_custom_call.1} parent=1 // pred_check_branch
      %39 = sbr.rel (0) target = $region17
    $region16: #{tpu_custom_call.1} parent=1 // pred_region
      %41 = dma.done [#allocation6], 64
    $region17: #{tpu_custom_call.1} parent=1 // pred_fallthru
      _
    %v42 = vld [vmem:[#allocation2] sm:$0xff]
    %v43 = vld [vmem:[#allocation2 + $0x8] sm:$0xff]
    %v44 = vld [vmem:[#allocation5] sm:$0xf]
    %47 = vrot.lane.b32.xlu0 %v42, 32
    %v48 = vpop.permute.xlu0 %47
    %49 = vrot.lane.b32.xlu0 %v43, 32
    %v50 = vpop.permute.xlu0 %49
    %53 = vrot.lane.b32.xlu0 %v42, 64
    %v54 = vpop.permute.xlu0 %53
    %55 = vrot.lane.b32.xlu0 %v43, 64
    %v56 = vpop.permute.xlu0 %55
    %59 = vrot.lane.b32.xlu0 %v42, 96
    %v60 = vpop.permute.xlu0 %59
    %61 = vrot.lane.b32.xlu0 %v43, 96
    %v62 = vpop.permute.xlu0 %61
    %vm65 = vcmask 261120
    %v66 = vsel %vm65, %v42, %v48
    %v67 = vsel %vm65, %v43, %v50
    %vm68 = vcmask 523264
    %v69 = vsel %vm68, %v66, %v54
    %v70 = vsel %vm68, %v67, %v56
    %vm71 = vcmask 785408
    %v72 = vsel %vm71, %v69, %v60
    %v73 = vsel %vm71, %v70, %v62
    %v75 = vperm.slane %v44, 0
    %v76 = vperm.slane %v44, 1
    %v77 = vperm.slane %v44, 2
    %v78 = vperm.slane %v44, 3
    %v83 = vadd.f32 %v72, %v75
    %v84 = vadd.f32 %v72, %v76
    %v85 = vadd.f32 %v72, %v77
    %v86 = vadd.f32 %v72, %v78
    %v87 = vadd.f32 %v73, %v75
    %v88 = vadd.f32 %v73, %v76
    %v89 = vadd.f32 %v73, %v77
    %v90 = vadd.f32 %v73, %v78
    %v91 = vxor.u32 %v83, 2147483648
    %v92 = vxor.u32 %v84, 2147483648
    %v93 = vxor.u32 %v85, 2147483648
    %v94 = vxor.u32 %v86, 2147483648
    %v95 = vxor.u32 %v87, 2147483648
    %v96 = vxor.u32 %v88, 2147483648
    %v97 = vxor.u32 %v89, 2147483648
    %v98 = vxor.u32 %v90, 2147483648
    %v99 = vmul.f32 %v91, 1.442695
    %v100 = vpow.pop %v99
    %v101 = vmul.f32 %v92, 1.442695
    %v102 = vpow.pop %v101
    %v103 = vmul.f32 %v93, 1.442695
    %v104 = vpow.pop %v103
    %v105 = vmul.f32 %v94, 1.442695
    %v106 = vpow.pop %v105
    %v107 = vmul.f32 %v95, 1.442695
    %v108 = vpow.pop %v107
    %v109 = vmul.f32 %v96, 1.442695
    %v110 = vpow.pop %v109
    %v111 = vmul.f32 %v97, 1.442695
    %v112 = vpow.pop %v111
    %v113 = vmul.f32 %v98, 1.442695
    %v114 = vpow.pop %v113
    %v115 = vadd.f32 %v100, 1.0
    %v116 = vadd.f32 %v102, 1.0
    %v117 = vadd.f32 %v104, 1.0
    %v118 = vadd.f32 %v106, 1.0
    %v119 = vadd.f32 %v108, 1.0
    %v120 = vadd.f32 %v110, 1.0
    %v121 = vadd.f32 %v112, 1.0
    %v122 = vadd.f32 %v114, 1.0
    %v123 = vrcp.pop %v115
    %v124 = vmul.f32 %v115, %v123
    %v125 = vsub.f32 1.0, %v124
    %v126 = vmul.f32 %v123, %v125
    %v127 = vadd.f32 %v123, %v126
    %vm128 = vweird.f32 %v115
    %vm129 = vweird.f32 %v123
    %vm130 = vmor %vm128, %vm129
    %v131 = vsel %vm130, %v123, %v127
    %v132 = vand.u32 2147483647, %v115
    %vm133 = vcmp.eq.f32.partialorder %v132, 8.507059e+37
    %v134 = vand.u32 %v115, 2147483648
    %v135 = vor.u32 1.1754944e-38, %v134
    %v136 = vsel %vm133, %v135, %v131
    %v137 = vmul.f32 1.0, %v136
    %v138 = vrcp.pop %v116
    %v139 = vmul.f32 %v116, %v138
    %v140 = vsub.f32 1.0, %v139
    %v141 = vmul.f32 %v138, %v140
    %v142 = vadd.f32 %v138, %v141
    %vm143 = vweird.f32 %v116
    %vm144 = vweird.f32 %v138
    %vm145 = vmor %vm143, %vm144
    %v146 = vsel %vm145, %v138, %v142
    %v147 = vand.u32 2147483647, %v116
    %vm148 = vcmp.eq.f32.partialorder %v147, 8.507059e+37
    %v149 = vand.u32 %v116, 2147483648
    %v150 = vor.u32 1.1754944e-38, %v149
    %v151 = vsel %vm148, %v150, %v146
    %v152 = vmul.f32 1.0, %v151
    %v153 = vrcp.pop %v117
    %v154 = vmul.f32 %v117, %v153
    %v155 = vsub.f32 1.0, %v154
    %v156 = vmul.f32 %v153, %v155
    %v157 = vadd.f32 %v153, %v156
    %vm158 = vweird.f32 %v117
    %vm159 = vweird.f32 %v153
    %vm160 = vmor %vm158, %vm159
    %v161 = vsel %vm160, %v153, %v157
    %v162 = vand.u32 2147483647, %v117
    %vm163 = vcmp.eq.f32.partialorder %v162, 8.507059e+37
    %v164 = vand.u32 %v117, 2147483648
    %v165 = vor.u32 1.1754944e-38, %v164
    %v166 = vsel %vm163, %v165, %v161
    %v167 = vmul.f32 1.0, %v166
    %v168 = vrcp.pop %v118
    %v169 = vmul.f32 %v118, %v168
    %v170 = vsub.f32 1.0, %v169
    %v171 = vmul.f32 %v168, %v170
    %v172 = vadd.f32 %v168, %v171
    %vm173 = vweird.f32 %v118
    %vm174 = vweird.f32 %v168
    %vm175 = vmor %vm173, %vm174
    %v176 = vsel %vm175, %v168, %v172
    %v177 = vand.u32 2147483647, %v118
    %vm178 = vcmp.eq.f32.partialorder %v177, 8.507059e+37
    %v179 = vand.u32 %v118, 2147483648
    %v180 = vor.u32 1.1754944e-38, %v179
    %v181 = vsel %vm178, %v180, %v176
    %v182 = vmul.f32 1.0, %v181
    %v183 = vrcp.pop %v119
    %v184 = vmul.f32 %v119, %v183
    %v185 = vsub.f32 1.0, %v184
    %v186 = vmul.f32 %v183, %v185
    %v187 = vadd.f32 %v183, %v186
    %vm188 = vweird.f32 %v119
    %vm189 = vweird.f32 %v183
    %vm190 = vmor %vm188, %vm189
    %v191 = vsel %vm190, %v183, %v187
    %v192 = vand.u32 2147483647, %v119
    %vm193 = vcmp.eq.f32.partialorder %v192, 8.507059e+37
    %v194 = vand.u32 %v119, 2147483648
    %v195 = vor.u32 1.1754944e-38, %v194
    %v196 = vsel %vm193, %v195, %v191
    %v197 = vmul.f32 1.0, %v196
    %v198 = vrcp.pop %v120
    %v199 = vmul.f32 %v120, %v198
    %v200 = vsub.f32 1.0, %v199
    %v201 = vmul.f32 %v198, %v200
    %v202 = vadd.f32 %v198, %v201
    %vm203 = vweird.f32 %v120
    %vm204 = vweird.f32 %v198
    %vm205 = vmor %vm203, %vm204
    %v206 = vsel %vm205, %v198, %v202
    %v207 = vand.u32 2147483647, %v120
    %vm208 = vcmp.eq.f32.partialorder %v207, 8.507059e+37
    %v209 = vand.u32 %v120, 2147483648
    %v210 = vor.u32 1.1754944e-38, %v209
    %v211 = vsel %vm208, %v210, %v206
    %v212 = vmul.f32 1.0, %v211
    %v213 = vrcp.pop %v121
    %v214 = vmul.f32 %v121, %v213
    %v215 = vsub.f32 1.0, %v214
    %v216 = vmul.f32 %v213, %v215
    %v217 = vadd.f32 %v213, %v216
    %vm218 = vweird.f32 %v121
    %vm219 = vweird.f32 %v213
    %vm220 = vmor %vm218, %vm219
    %v221 = vsel %vm220, %v213, %v217
    %v222 = vand.u32 2147483647, %v121
    %vm223 = vcmp.eq.f32.partialorder %v222, 8.507059e+37
    %v224 = vand.u32 %v121, 2147483648
    %v225 = vor.u32 1.1754944e-38, %v224
    %v226 = vsel %vm223, %v225, %v221
    %v227 = vmul.f32 1.0, %v226
    %v228 = vrcp.pop %v122
    %v229 = vmul.f32 %v122, %v228
    %v230 = vsub.f32 1.0, %v229
    %v231 = vmul.f32 %v228, %v230
    %v232 = vadd.f32 %v228, %v231
    %vm233 = vweird.f32 %v122
    %vm234 = vweird.f32 %v228
    %vm235 = vmor %vm233, %vm234
    %v236 = vsel %vm235, %v228, %v232
    %v237 = vand.u32 2147483647, %v122
    %vm238 = vcmp.eq.f32.partialorder %v237, 8.507059e+37
    %v239 = vand.u32 %v122, 2147483648
    %v240 = vor.u32 1.1754944e-38, %v239
    %v241 = vsel %vm238, %v240, %v236
    %v242 = vmul.f32 1.0, %v241
    %243 = vst [vmem:[#allocation7] sm:$0xff] %v137
    %244 = vst [vmem:[#allocation7 + $0x8] sm:$0xff] %v152
    %245 = vst [vmem:[#allocation7 + $0x10] sm:$0xff] %v167
    %246 = vst [vmem:[#allocation7 + $0x18] sm:$0xff] %v182
    %247 = vst [vmem:[#allocation7 + $0x20] sm:$0xff] %v197
    %248 = vst [vmem:[#allocation7 + $0x28] sm:$0xff] %v212
    %249 = vst [vmem:[#allocation7 + $0x30] sm:$0xff] %v227
    %250 = vst [vmem:[#allocation7 + $0x38] sm:$0xff] %v242
    // Predicated region
    $region18: #{tpu_custom_call.1} parent=1 // pred_check
      _
    $region19: #{tpu_custom_call.1} parent=1 // pred_check_branch
      %252 = sbr.rel (0) target = $region21
    $region20: #{tpu_custom_call.1} parent=1 // pred_region
      %254 = vsyncadd [#allocation4], 0
      %s255 = sshll.u32 [#allocation7], 4
      %s256 = int_to_ptr.vmem [resolvable:$true] %s255
      %s257 = sshll.u32 %s2, 4
      %s258 = int_to_ptr.hbm [resolvable:$true] %s257
      %263 = dma.vmem_to_hbm [thread:$0]  %s256, 1024, %s258, [#allocation4], 512, 512, 32
    $region21: #{tpu_custom_call.1} parent=1 // pred_fallthru
      _
    // Predicated region
    $region22: #{tpu_custom_call.1} parent=1 // pred_check
      _
    $region23: #{tpu_custom_call.1} parent=1 // pred_check_branch
      %265 = sbr.rel (0) target = $region25
    $region24: #{tpu_custom_call.1} parent=1 // pred_region
      %267 = dma.done [#allocation4], 1024
    $region25: #{tpu_custom_call.1} parent=1 // pred_fallthru
      _
    %268 = vsyncpa [#allocation3], 1
    %269 = vsyncpa [#allocation6], 1
    %270 = vsyncpa [#allocation4], 1

</llo_original>
